<compile_context>
chip_gen: v6e
topology: v6e:2x2x1
jax: 0.10.0
libtpu: 0.0.40
codegen_flags: <defaults>
</compile_context>

<pallas_src>
import functools
import math

import jax
import jax.numpy as jnp
from jax.experimental import pallas as pl
from jax.experimental.pallas import tpu as pltpu

# 48 MiB scoped-VMEM budget: fits every tile below with headroom on v7x's 64 MiB
# physical VMEM while raising the 32 MiB default for v5e/v6e.
_VMEM_LIMIT = 48 * 1024 * 1024


def _round_up(x, m):
    return ((x + m - 1) // m) * m


def _pad_rows(x, m_pad):
    m = x.shape[0]
    return x if m_pad == m else jnp.pad(x, ((0, m_pad - m), (0, 0)))


def _cparams(semantics):
    return pltpu.CompilerParams(dimension_semantics=semantics,
                                vmem_limit_bytes=_VMEM_LIMIT)


def _param_spec(shape):
    """Grid-invariant operand (weight / bias / LN param): constant index_map,
    single-buffered so it is not double-buffered in VMEM."""
    return pl.BlockSpec(shape, lambda i: (0,) * len(shape),
                        pipeline_mode=pl.Buffered(1))


def _pick_tm(m, tm):
    """Row-tile size: as large as requested, but split into >= 2 grid steps when
    there is enough work so both TensorCores on v7x get used."""
    mp8 = _round_up(m, 8)
    tm = min(tm, mp8)
    if tm == mp8 and mp8 >= 256:
        tm = _round_up(mp8 // 2, 8)
    return tm


def _gelu(x):
    # tanh-approx GELU in f32 (v5e VPU/EUP have no bf16 path).
    c = math.sqrt(2.0 / math.pi)
    return 0.5 * x * (1.0 + jnp.tanh(c * (x + 0.044715 * x * x * x)))


# ----------------------------- dense kernels ------------------------------- #

def _linear_kernel(x_ref, w_ref, b_ref, o_ref):
    x = x_ref[...].astype(jnp.bfloat16)
    y = jnp.dot(x, w_ref[...], preferred_element_type=jnp.float32)
    y = y + b_ref[...].astype(jnp.float32)
    o_ref[...] = y.astype(o_ref.dtype)


def linear(x, w, b, out_dtype=jnp.bfloat16, tm=512):
    """y = x @ w + b; row-tiled, ragged last tile padded."""
    M, K = x.shape
    Kw, N = w.shape
    assert K == Kw
    tm = _pick_tm(M, tm)
    Mp = _round_up(M, tm)
    xp = _pad_rows(x, Mp)
    out = pl.pallas_call(
        _linear_kernel,
        out_shape=jax.ShapeDtypeStruct((Mp, N), out_dtype),
        grid=(Mp // tm,),
        in_specs=[
            pl.BlockSpec((tm, K), lambda i: (i, 0)),
            _param_spec((K, N)),
            _param_spec((1, N)),
        ],
        out_specs=pl.BlockSpec((tm, N), lambda i: (i, 0)),
        compiler_params=_cparams(("parallel",)),
    )(xp, w, b.reshape(1, N))
    return out[:M] if Mp != M else out


def _linear_add_ln_kernel(x_ref, w_ref, b_ref, res_ref, g_ref, beta_ref, o_ref, *, eps):
    x = x_ref[...].astype(jnp.bfloat16)
    y = jnp.dot(x, w_ref[...], preferred_element_type=jnp.float32)
    y = y + b_ref[...].astype(jnp.float32) + res_ref[...].astype(jnp.float32)
    mean = jnp.mean(y, axis=-1, keepdims=True)
    var = jnp.mean(jnp.square(y - mean), axis=-1, keepdims=True)
    inv = jax.lax.rsqrt(var + eps)
    o_ref[...] = ((y - mean) * inv * g_ref[...].astype(jnp.float32)
                  + beta_ref[...].astype(jnp.float32)).astype(o_ref.dtype)


def linear_add_ln(x, w, b, residual, gamma, beta, eps=1e-12, tm=512):
    """LayerNorm((x @ w + b) + residual), fused into the matmul epilogue."""
    M, K = x.shape
    Kw, N = w.shape
    assert K == Kw and residual.shape == (M, N)
    tm = _pick_tm(M, tm)
    Mp = _round_up(M, tm)
    xp, rp = _pad_rows(x, Mp), _pad_rows(residual, Mp)
    out = pl.pallas_call(
        functools.partial(_linear_add_ln_kernel, eps=eps),
        out_shape=jax.ShapeDtypeStruct((Mp, N), jnp.bfloat16),
        grid=(Mp // tm,),
        in_specs=[
            pl.BlockSpec((tm, K), lambda i: (i, 0)),
            _param_spec((K, N)),
            _param_spec((1, N)),
            pl.BlockSpec((tm, N), lambda i: (i, 0)),
            _param_spec((1, N)),
            _param_spec((1, N)),
        ],
        out_specs=pl.BlockSpec((tm, N), lambda i: (i, 0)),
        compiler_params=_cparams(("parallel",)),
    )(xp, w, b.reshape(1, N), rp, gamma.reshape(1, N), beta.reshape(1, N))
    return out[:M] if Mp != M else out


def _ffn_kernel(x_ref, w1_ref, b1_ref, w2_ref, b2_ref, g_ref, beta_ref, o_ref, *, eps):
    x = x_ref[...]
    h = jnp.dot(x.astype(jnp.bfloat16), w1_ref[...],
                preferred_element_type=jnp.float32)          # [tm, I] stays on-chip
    h = _gelu(h + b1_ref[...].astype(jnp.float32))
    y = jnp.dot(h.astype(jnp.bfloat16), w2_ref[...],
                preferred_element_type=jnp.float32)
    y = y + b2_ref[...].astype(jnp.float32) + x.astype(jnp.float32)   # residual = FFN input
    mean = jnp.mean(y, axis=-1, keepdims=True)
    var = jnp.mean(jnp.square(y - mean), axis=-1, keepdims=True)
    inv = jax.lax.rsqrt(var + eps)
    o_ref[...] = ((y - mean) * inv * g_ref[...].astype(jnp.float32)
                  + beta_ref[...].astype(jnp.float32)).astype(o_ref.dtype)


def ffn(x, w1, b1, w2, b2, gamma, beta, eps=1e-12, tm=256):
    """Fused FFN: LayerNorm(GELU(x@w1+b1)@w2 + b2 + x); the [tm, intermediate]
    activation never touches HBM."""
    M, H = x.shape
    Hw, I = w1.shape
    assert H == Hw and w2.shape == (I, H)
    tm = _pick_tm(M, tm)
    Mp = _round_up(M, tm)
    xp = _pad_rows(x, Mp)
    out = pl.pallas_call(
        functools.partial(_ffn_kernel, eps=eps),
        out_shape=jax.ShapeDtypeStruct((Mp, H), jnp.bfloat16),
        grid=(Mp // tm,),
        in_specs=[
            pl.BlockSpec((tm, H), lambda i: (i, 0)),
            _param_spec((H, I)),
            _param_spec((1, I)),
            _param_spec((I, H)),
            _param_spec((1, H)),
            _param_spec((1, H)),
            _param_spec((1, H)),
        ],
        out_specs=pl.BlockSpec((tm, H), lambda i: (i, 0)),
        compiler_params=_cparams(("parallel",)),
    )(xp, w1, b1.reshape(1, I), w2, b2.reshape(1, H),
      gamma.reshape(1, H), beta.reshape(1, H))
    return out[:M] if Mp != M else out


def _qkv_kernel(x_ref, w_ref, b_ref, q_ref, k_ref, v_ref, *, hidden):
    x = x_ref[...].astype(jnp.bfloat16)
    y = jnp.dot(x, w_ref[...], preferred_element_type=jnp.float32)
    y = y + b_ref[...].astype(jnp.float32)                   # [tm, 3H]
    q_ref[...] = y[:, :hidden].astype(q_ref.dtype)
    k_ref[...] = y[:, hidden:2 * hidden].astype(k_ref.dtype)
    v_ref[...] = y[:, 2 * hidden:].astype(v_ref.dtype)


def qkv_proj(x, wqkv, bqkv, hidden, tm=512):
    """Fused Q/K/V projection: one pallas_call, x read once, packed [H,3H] weight."""
    M, K = x.shape
    tm = _pick_tm(M, tm)
    Mp = _round_up(M, tm)
    xp = _pad_rows(x, Mp)
    shp = jax.ShapeDtypeStruct((Mp, hidden), jnp.bfloat16)
    row_spec = pl.BlockSpec((tm, hidden), lambda i: (i, 0))
    q, k, v = pl.pallas_call(
        functools.partial(_qkv_kernel, hidden=hidden),
        out_shape=(shp, shp, shp),
        grid=(Mp // tm,),
        in_specs=[
            pl.BlockSpec((tm, K), lambda i: (i, 0)),
            _param_spec((K, 3 * hidden)),
            _param_spec((1, 3 * hidden)),
        ],
        out_specs=(row_spec, row_spec, row_spec),
        compiler_params=_cparams(("parallel",)),
    )(xp, wqkv, bqkv.reshape(1, 3 * hidden))
    if Mp != M:
        q, k, v = q[:M], k[:M], v[:M]
    return q, k, v


# ------------------------------- LayerNorm --------------------------------- #

def _layernorm_kernel(x_ref, g_ref, b_ref, o_ref, *, eps):
    x = x_ref[...].astype(jnp.float32)
    mean = jnp.mean(x, axis=-1, keepdims=True)
    var = jnp.mean(jnp.square(x - mean), axis=-1, keepdims=True)
    inv = jax.lax.rsqrt(var + eps)
    o_ref[...] = ((x - mean) * inv * g_ref[...].astype(jnp.float32)
                  + b_ref[...].astype(jnp.float32)).astype(o_ref.dtype)


def layernorm(x, gamma, beta, eps=1e-12, tm=512):
    """Row-tiled LayerNorm over [M, H] (embedding LN); bf16 output."""
    M, H = x.shape
    tm = _pick_tm(M, tm)
    Mp = _round_up(M, tm)
    xp = _pad_rows(x, Mp)
    out = pl.pallas_call(
        functools.partial(_layernorm_kernel, eps=eps),
        out_shape=jax.ShapeDtypeStruct((Mp, H), jnp.bfloat16),
        grid=(Mp // tm,),
        in_specs=[
            pl.BlockSpec((tm, H), lambda i: (i, 0)),
            _param_spec((1, H)),
            _param_spec((1, H)),
        ],
        out_specs=pl.BlockSpec((tm, H), lambda i: (i, 0)),
        compiler_params=_cparams(("parallel",)),
    )(xp, gamma.reshape(1, H), beta.reshape(1, H))
    return out[:M] if Mp != M else out


# ----------------------- flash-style self-attention ------------------------ #

def _attention_kernel(q_ref, k_ref, v_ref, mask_ref, o_ref,
                      m_sc, l_sc, acc_sc, *, n_heads, scale):
    ki = pl.program_id(2)

    @pl.when(ki == 0)
    def _():
        m_sc[...] = jnp.full(m_sc.shape, -1e30, jnp.float32)
        l_sc[...] = jnp.zeros(l_sc.shape, jnp.float32)
        acc_sc[...] = jnp.zeros(acc_sc.shape, jnp.float32)

    H = q_ref.shape[2]
    tq = q_ref.shape[1]
    dh = H // n_heads

    # additive key-position mask: (1 - m) * -10000, shape [1, tk]
    neg_bias = (1.0 - mask_ref[0].astype(jnp.float32)) * -10000.0

    qb = q_ref[0].astype(jnp.bfloat16)                    # [tq, H]
    kb = k_ref[0].astype(jnp.bfloat16)                    # [tk, H]
    vb = v_ref[0].astype(jnp.bfloat16)                    # [tk, H]

    # Read the running statistics ONCE (full width), update in registers, write
    # them back ONCE per k-step with lane-dense stores (no per-head masked
    # read-modify-write stores on the vector-store slot).
    m_prev = m_sc[...]                                    # [tq, nH]
    l_prev = l_sc[...]                                    # [tq, nH]
    acc_prev = acc_sc[...]                                # [tq, H]

    m_parts, l_parts, alpha_parts, pv_parts = [], [], [], []
    for h in range(n_heads):                              # statically unrolled
        cols = slice(h * dh, (h + 1) * dh)
        q_h, k_h, v_h = qb[:, cols], kb[:, cols], vb[:, cols]

        # TODO(synk): if Mosaic emits a per-step vxpose for this contracting-dim
        # form, K should instead be produced pre-transposed from qkv_proj so the
        # transpose is amortized over all q-tiles.
        s = jax.lax.dot_general(q_h, k_h, (((1,), (1,)), ((), ())),
                                preferred_element_type=jnp.float32)
        s = s * scale + neg_bias                          # [tq, tk]

        m_p = m_prev[:, h:h + 1]
        m_n = jnp.maximum(m_p, jnp.max(s, axis=-1, keepdims=True))
        a = jnp.exp(m_p - m_n)
        p = jnp.exp(s - m_n)
        l_parts.append(a * l_prev[:, h:h + 1] + jnp.sum(p, axis=-1, keepdims=True))
        pv_parts.append(jnp.dot(p.astype(jnp.bfloat16), v_h,
                                preferred_element_type=jnp.float32))
        m_parts.append(m_n)
        alpha_parts.append(jnp.broadcast_to(a, (tq, dh)))

    m_new = jnp.concatenate(m_parts, axis=-1)             # [tq, nH]
    l_new = jnp.concatenate(l_parts, axis=-1)             # [tq, nH]
    alpha_full = jnp.concatenate(alpha_parts, axis=-1)    # [tq, H]
    acc_new = alpha_full * acc_prev + jnp.concatenate(pv_parts, axis=-1)

    m_sc[...] = m_new
    l_sc[...] = l_new
    acc_sc[...] = acc_new

    @pl.when(ki == pl.num_programs(2) - 1)
    def _():
        inv = pl.reciprocal(l_new, approx=True)           # [tq, nH]
        inv_full = jnp.concatenate(
            [jnp.broadcast_to(inv[:, h:h + 1], (tq, dh)) for h in range(n_heads)],
            axis=-1)                                      # [tq, H]
        o_ref[0] = (acc_new * inv_full).astype(o_ref.dtype)   # one unmasked store


def attention(q, k, v, mask, n_heads, tile=256):
    """Online-softmax attention over [B, S, H]; grid (batch, q-tiles, k-tiles).

    The [S, S] score matrix is never materialized; per-(q-tile) accumulators live
    in VMEM scratch. Heads are handled as column slices of the lane-dense [tile, H]
    projections; all scratch/output stores are full-width.
    """
    B, S, H = q.shape
    assert H % n_heads == 0
    dh = H // n_heads
    t = min(tile, S)
    Sp = _round_up(S, t)
    if Sp != S:
        pad3 = ((0, 0), (0, Sp - S), (0, 0))
        q, k, v = jnp.pad(q, pad3), jnp.pad(k, pad3), jnp.pad(v, pad3)
        mask = jnp.pad(mask, ((0, 0), (0, 0), (0, Sp - S)))   # padded keys masked off
    n_t = Sp // t
    scale = 1.0 / math.sqrt(dh)
    out = pl.pallas_call(
        functools.partial(_attention_kernel, n_heads=n_heads, scale=scale),
        out_shape=jax.ShapeDtypeStruct((B, Sp, H), jnp.bfloat16),
        grid=(B, n_t, n_t),
        in_specs=[
            pl.BlockSpec((1, t, H), lambda b, qi, ki: (b, qi, 0)),
            pl.BlockSpec((1, t, H), lambda b, qi, ki: (b, ki, 0)),
            pl.BlockSpec((1, t, H), lambda b, qi, ki: (b, ki, 0)),
            pl.BlockSpec((1, 1, t), lambda b, qi, ki: (b, 0, ki)),
        ],
        out_specs=pl.BlockSpec((1, t, H), lambda b, qi, ki: (b, qi, 0)),
        scratch_shapes=[
            pltpu.VMEM((t, n_heads), jnp.float32),   # running max, per head
            pltpu.VMEM((t, n_heads), jnp.float32),   # running denom, per head
            pltpu.VMEM((t, H), jnp.float32),         # running weighted V sum
        ],
        compiler_params=_cparams(("parallel", "parallel", "arbitrary")),
    )(q, k, v, mask)
    return out[:, :S] if Sp != S else out


# --------------------------- parameter construction ------------------------ #

def init_params(key, *, vocab_size, hidden, n_layers, n_heads, intermediate,
                max_pos, class_num):
    def nrm(k, shape):
        return jax.random.normal(k, shape, jnp.float32) * 0.02

    keys = jax.random.split(key, 4 + n_layers)
    c_pad = _round_up(class_num, 128)                 # lane-dense classifier output
    w_cls = nrm(keys[3], (hidden, class_num))
    params = {
        "n_heads": n_heads,
        "class_num": class_num,
        "word_emb": nrm(keys[0], (vocab_size, hidden)),
        "pos_emb": nrm(keys[1], (max_pos, hidden)),
        "type_emb": nrm(keys[2], (2, hidden)),
        "emb_ln_g": jnp.ones((hidden,), jnp.float32),
        "emb_ln_b": jnp.zeros((hidden,), jnp.float32),
        "layers": [],
        "w_cls": jnp.pad(w_cls, ((0, 0), (0, c_pad - class_num))).astype(jnp.bfloat16),
        "b_cls": jnp.zeros((c_pad,), jnp.float32),
    }
    for li in range(n_layers):
        lk = jax.random.split(keys[4 + li], 6)
        wq = nrm(lk[0], (hidden, hidden))
        wk = nrm(lk[1], (hidden, hidden))
        wv = nrm(lk[2], (hidden, hidden))
        params["layers"].append({
            # fused [H, 3H] QKV weight, stored bf16 for the MXU
            "wqkv": jnp.concatenate([wq, wk, wv], axis=1).astype(jnp.bfloat16),
            "bqkv": jnp.zeros((3 * hidden,), jnp.float32),
            "wo": nrm(lk[3], (hidden, hidden)).astype(jnp.bfloat16),
            "bo": jnp.zeros((hidden,), jnp.float32),
            "ln1_g": jnp.ones((hidden,), jnp.float32),
            "ln1_b": jnp.zeros((hidden,), jnp.float32),
            "w1": nrm(lk[4], (hidden, intermediate)).astype(jnp.bfloat16),
            "b1": jnp.zeros((intermediate,), jnp.float32),
            "w2": nrm(lk[5], (intermediate, hidden)).astype(jnp.bfloat16),
            "b2": jnp.zeros((hidden,), jnp.float32),
            "ln2_g": jnp.ones((hidden,), jnp.float32),
            "ln2_b": jnp.zeros((hidden,), jnp.float32),
        })
    return params


# ------------------------------- forward pass ------------------------------ #

def bert_for_ner_forward(params, input_ids, attention_mask):
    """Equivalent of BertForNER.forward(input_ids, attention_mask) -> logits."""
    B, S = input_ids.shape
    H = params["word_emb"].shape[1]
    nH = params["n_heads"]
    C = params["class_num"]

    # embeddings (word + position + token-type 0) -> LayerNorm (bf16 out)
    # TODO(synk): token_type_ids input not exposed (reference always uses type 0).
    x = (params["word_emb"][input_ids]
         + params["pos_emb"][:S][None, :, :]
         + params["type_emb"][0][None, None, :])
    x = layernorm(x.reshape(B * S, H), params["emb_ln_g"], params["emb_ln_b"])

    mask_f = attention_mask.astype(jnp.float32).reshape(B, 1, S)   # fed via index_map

    for layer in params["layers"]:
        xf = x                                                     # [B*S, H] bf16
        q, k, v = qkv_proj(xf, layer["wqkv"], layer["bqkv"], H)
        ctx = attention(q.reshape(B, S, H), k.reshape(B, S, H),
                        v.reshape(B, S, H), mask_f, nH)            # [B, S, H] bf16
        x = linear_add_ln(ctx.reshape(B * S, H), layer["wo"], layer["bo"],
                          xf, layer["ln1_g"], layer["ln1_b"])
        x = ffn(x, layer["w1"], layer["b1"], layer["w2"], layer["b2"],
                layer["ln2_g"], layer["ln2_b"])

    # classifier head (weight padded to 128 output lanes; slice back to class_num)
    logits = linear(x, params["w_cls"], params["b_cls"], out_dtype=jnp.float32)[:, :C]
    return logits.reshape(B, S, C)

# TODO(synk): CRF decode / negative-log-likelihood and CrossEntropyLoss(ignore_index=-1)
# training branches (labels is not None / use_crf=True) are not implemented; this
# reproduces the inference path that returns logits.


if __name__ == "__main__":
    B, S = 2, 8
    VOCAB, HIDDEN, N_LAYERS, N_HEADS, INTERMEDIATE = 100, 32, 2, 2, 64
    MAX_POS, CLASS_NUM = 64, 9

    key = jax.random.PRNGKey(0)
    k_param, k_ids = jax.random.split(key)

    params = init_params(
        k_param, vocab_size=VOCAB, hidden=HIDDEN, n_layers=N_LAYERS,
        n_heads=N_HEADS, intermediate=INTERMEDIATE, max_pos=MAX_POS,
        class_num=CLASS_NUM)

    input_ids = jax.random.randint(k_ids, (B, S), 0, VOCAB, dtype=jnp.int32)
    # padding mask: sequence 0 full length, sequence 1 has 5 real tokens
    attention_mask = jnp.array(
        [[1, 1, 1, 1, 1, 1, 1, 1],
         [1, 1, 1, 1, 1, 0, 0, 0]], dtype=jnp.int32)

    logits = bert_for_ner_forward(params, input_ids, attention_mask)
    logits = jax.block_until_ready(logits)
    assert logits.shape == (B, S, CLASS_NUM)
    assert bool(jnp.all(jnp.isfinite(logits)))
    print("KERNEL_OK")
</pallas_src>

<mosaic_0001>
module attributes {stable_mosaic.version = 11 : i64} {
  func.func @_layernorm_kernel(%arg0: i32, %arg1: memref<16x32xf32, #tpu.memory_space<vmem>>, %arg2: memref<1x32xf32, #tpu.memory_space<vmem>>, %arg3: memref<1x32xf32, #tpu.memory_space<vmem>>, %arg4: memref<16x32xbf16, #tpu.memory_space<vmem>>) attributes {dimension_semantics = [#tpu.dimension_semantics<parallel>], iteration_bounds = array<i64: 1>, scalar_prefetch = 0 : i64, scratch_operands = 0 : i64, tpu.core_type = #tpu.core_type<tc>, window_params = [{transform_indices = @transform_0, window_bounds = array<i64: 16, 32>}, {pipeline_mode = #tpu.pipeline_mode<synchronous>, transform_indices = @transform_1, window_bounds = array<i64: 1, 32>}, {pipeline_mode = #tpu.pipeline_mode<synchronous>, transform_indices = @transform_2, window_bounds = array<i64: 1, 32>}, {transform_indices = @transform_3, window_bounds = array<i64: 16, 32>}]} {
    %c0 = arith.constant 0 : index
    %c0_0 = arith.constant 0 : index
    %0 = vector.load %arg1[%c0, %c0_0] : memref<16x32xf32, #tpu.memory_space<vmem>>, vector<16x32xf32>
    %cst = arith.constant dense<0.000000e+00> : vector<16xf32>
    %1 = vector.multi_reduction <add>, %0, %cst [1] : vector<16x32xf32> to vector<16xf32>
    %2 = vector.shape_cast %1 : vector<16xf32> to vector<16x1xf32>
    %cst_1 = arith.constant 3.200000e+01 : f32
    %3 = vector.broadcast %cst_1 : f32 to vector<16x1xf32>
    %4 = arith.divf %2, %3 : vector<16x1xf32>
    %5 = vector.broadcast %4 : vector<16x1xf32> to vector<16x32xf32>
    %6 = arith.subf %0, %5 : vector<16x32xf32>
    %7 = arith.mulf %6, %6 : vector<16x32xf32>
    %cst_2 = arith.constant dense<0.000000e+00> : vector<16xf32>
    %8 = vector.multi_reduction <add>, %7, %cst_2 [1] : vector<16x32xf32> to vector<16xf32>
    %9 = vector.shape_cast %8 : vector<16xf32> to vector<16x1xf32>
    %cst_3 = arith.constant 3.200000e+01 : f32
    %10 = vector.broadcast %cst_3 : f32 to vector<16x1xf32>
    %11 = arith.divf %9, %10 : vector<16x1xf32>
    %cst_4 = arith.constant 9.99999996E-13 : f32
    %12 = vector.broadcast %cst_4 : f32 to vector<16x1xf32>
    %13 = arith.addf %11, %12 : vector<16x1xf32>
    %14 = math.rsqrt %13 : vector<16x1xf32>
    %15 = vector.broadcast %4 : vector<16x1xf32> to vector<16x32xf32>
    %16 = arith.subf %0, %15 : vector<16x32xf32>
    %17 = vector.broadcast %14 : vector<16x1xf32> to vector<16x32xf32>
    %18 = arith.mulf %16, %17 : vector<16x32xf32>
    %c0_5 = arith.constant 0 : index
    %c0_6 = arith.constant 0 : index
    %19 = vector.load %arg2[%c0_5, %c0_6] : memref<1x32xf32, #tpu.memory_space<vmem>>, vector<1x32xf32>
    %20 = vector.broadcast %19 : vector<1x32xf32> to vector<16x32xf32>
    %21 = arith.mulf %18, %20 : vector<16x32xf32>
    %c0_7 = arith.constant 0 : index
    %c0_8 = arith.constant 0 : index
    %22 = vector.load %arg3[%c0_7, %c0_8] : memref<1x32xf32, #tpu.memory_space<vmem>>, vector<1x32xf32>
    %23 = vector.broadcast %22 : vector<1x32xf32> to vector<16x32xf32>
    %24 = arith.addf %21, %23 : vector<16x32xf32>
    %25 = arith.truncf %24 : vector<16x32xf32> to vector<16x32xbf16>
    %c0_9 = arith.constant 0 : index
    %c0_10 = arith.constant 0 : index
    %26 = vector.load %arg4[%c0_9, %c0_10] : memref<16x32xbf16, #tpu.memory_space<vmem>>, vector<16x32xbf16>
    tpu.vector_store %arg4[%c0_9, %c0_10], %25 {strides = array<i32>} : memref<16x32xbf16, #tpu.memory_space<vmem>>, vector<16x32xbf16>,
    return
  }
  func.func @transform_0(%arg0: i32) -> (i32, i32) {
    %c0_i32 = arith.constant 0 : i32
    %c0_i32_0 = arith.constant 0 : i32
    return %arg0, %c0_i32 : i32, i32
  }
  func.func @transform_1(%arg0: i32) -> (i32, i32) {
    %c0_i32 = arith.constant 0 : i32
    %c0_i32_0 = arith.constant 0 : i32
    %c0_i32_1 = arith.constant 0 : i32
    return %c0_i32, %c0_i32_0 : i32, i32
  }
  func.func @transform_2(%arg0: i32) -> (i32, i32) {
    %c0_i32 = arith.constant 0 : i32
    %c0_i32_0 = arith.constant 0 : i32
    %c0_i32_1 = arith.constant 0 : i32
    return %c0_i32, %c0_i32_0 : i32, i32
  }
  func.func @transform_3(%arg0: i32) -> (i32, i32) {
    %c0_i32 = arith.constant 0 : i32
    %c0_i32_0 = arith.constant 0 : i32
    return %arg0, %c0_i32 : i32, i32
  }
}

</mosaic_0001>

<llo_original>
// kernel: tpu_custom_call.1
$region0: #{tpu_custom_call.1}
  #allocation0 [shape = 'u32[]', space=smem, size = 0x4, offset = 0x4, fixed_abs, tag = 'smem constant byte address 0x4 - core index']
  #allocation1 [shape = 'u32[144,128]{1,0:T(1,128)}', space=vmem, size = 0x12000, scoped, tag = 'internal scratch']
  %s0 = inlined_call_operand.hbm [shape: f32[16,32], index: 0, kind: input, shape index: {}]
  %s1 = inlined_call_operand.vmem [shape: f32[1,32], index: 1, kind: input, shape index: {}]
  %s2 = inlined_call_operand.vmem [shape: f32[1,32], index: 2, kind: input, shape index: {}]
  %s3 = inlined_call_operand.hbm [shape: bf16[16,32], index: 3, kind: output, shape index: {}]
  %s4 = sld [smem:[#allocation0]]
  $region26: #{tpu_custom_call.1} parent=0
    _
  %s6 = ssub.s32 1, %s4
  %s7 = scalar_select 0, %s6, %s4
  $region1: #{tpu_custom_call.1} parent=0
    #allocation2 [shape = 'u8[8192]{0}', space=vmem, size = 0x2000, scoped, tag = 'input window, operand 0, single buffered']
    #allocation3 [shape = 's32[1]{0}', space=sflag, size = 0x4, scoped, tag = 'scoped memory for tpu_custom_call.1']
    #allocation4 [shape = 's32[1]{0}', space=sflag, size = 0x4, scoped, tag = 'scoped memory for tpu_custom_call.1']
    #allocation5 [shape = 'u8[4096]{0}', space=vmem, size = 0x1000, scoped, tag = 'output window, operand 0, single buffered']
    %8 = vsyncpa [#allocation3], 0
    %9 = vsyncpa [#allocation4], 0
    // Predicated region
    $region2: #{tpu_custom_call.1} parent=1 // pred_check
      _
    $region3: #{tpu_custom_call.1} parent=1 // pred_check_branch
      %11 = sbr.rel (0) target = $region5
    $region4: #{tpu_custom_call.1} parent=1 // pred_region
      %s13 = ssub.s32 256, 256
      %14 = vsyncadd [#allocation3], %s13
      %s15 = sshll.u32 [#allocation2], 4
      %s16 = int_to_ptr.vmem [resolvable:$true] %s15
      %21 = dma.hbm_to_vmem [thread:$0]  %s0, 256, %s16, [#allocation3], 128, 128, 8
    $region5: #{tpu_custom_call.1} parent=1 // pred_fallthru
      _
    // Predicated region
    $region6: #{tpu_custom_call.1} parent=1 // pred_check
      _
    $region7: #{tpu_custom_call.1} parent=1 // pred_check_branch
      %23 = sbr.rel (0) target = $region9
    $region8: #{tpu_custom_call.1} parent=1 // pred_region
      _
    $region9: #{tpu_custom_call.1} parent=1 // pred_fallthru
      _
    // Predicated region
    $region10: #{tpu_custom_call.1} parent=1 // pred_check
      _
    $region11: #{tpu_custom_call.1} parent=1 // pred_check_branch
      %25 = sbr.rel (0) target = $region13
    $region12: #{tpu_custom_call.1} parent=1 // pred_region
      _
    $region13: #{tpu_custom_call.1} parent=1 // pred_fallthru
      _
    // Predicated region
    $region14: #{tpu_custom_call.1} parent=1 // pred_check
      _
    $region15: #{tpu_custom_call.1} parent=1 // pred_check_branch
      %27 = sbr.rel (0) target = $region17
    $region16: #{tpu_custom_call.1} parent=1 // pred_region
      %28 = dma.done [#allocation3], 256
    $region17: #{tpu_custom_call.1} parent=1 // pred_fallthru
      _
    %v29 = vld [vmem:[#allocation2] sm:$0xff]
    %v30 = vld [vmem:[#allocation2 + $0x8] sm:$0xff]
    %vm31 = vcmask 261120
    %v32 = vsel %vm31, %v29, 0.0
    %33 = vadd.xlane.f32.xlu0 %v32
    %v34 = vpop.xlane.xlu0 %33
    %v35 = vsel %vm31, %v30, 0.0
    %36 = vadd.xlane.f32.xlu0 %v35
    %v37 = vpop.xlane.xlu0 %36
    %v38 = vrcp.pop 32.0
    %v39 = vmul.f32 %v34, %v38
    %v40 = vmul.f32 %v37, %v38
    %v41 = vsub.f32 %v29, %v39
    %v42 = vsub.f32 %v30, %v40
    %v43 = vmul.f32 %v41, %v41
    %v44 = vmul.f32 %v42, %v42
    %v45 = vsel %vm31, %v43, 0.0
    %46 = vadd.xlane.f32.xlu0 %v45
    %v47 = vpop.xlane.xlu0 %46
    %v48 = vsel %vm31, %v44, 0.0
    %49 = vadd.xlane.f32.xlu0 %v48
    %v50 = vpop.xlane.xlu0 %49
    %v51 = vmul.f32 %v47, %v38
    %v52 = vmul.f32 %v50, %v38
    %v53 = vadd.f32 %v51, 1e-12
    %v54 = vadd.f32 %v52, 1e-12
    %v55 = vrsqrt.pop %v53
    %v56 = vrsqrt.pop %v54
    %v57 = vmul.f32 %v41, %v55
    %v58 = vmul.f32 %v42, %v56
    %v59 = vld [vmem:[%s1] sm:$0x1]
    %v61 = vlaneseq
    %v62 = vshrl.u32 %v61, 7
    %v63 = vsub.s32 0, %v62
    %v64 = vrot.slane %v59, %v63
    %v66 = vmul.f32 %v57, %v64
    %v67 = vmul.f32 %v58, %v64
    %v68 = vld [vmem:[%s2] sm:$0x1]
    %v70 = vlaneseq
    %v71 = vshrl.u32 %v70, 7
    %v72 = vsub.s32 0, %v71
    %v73 = vrot.slane %v68, %v72
    %v75 = vadd.f32 %v66, %v73
    %v76 = vadd.f32 %v67, %v73
    %v77 = vpack.c.bf16 %v76, %v75
    %v79 = vunpack.c.l.b16 %v77
    %v80 = vunpack.c.h.b16 %v77
    %v81 = vpack.c.b16 %v79, %v79
    %v82 = vpack.c.b16 %v80, %v80
    %vm85 = vcmask 257024
    %86 = vst.msk [vmem:[#allocation5] sm:$0xf] %vm85, %v81
    %87 = vst.msk [vmem:[#allocation5 + $0x4] sm:$0xf] %vm85, %v82
    // Predicated region
    $region18: #{tpu_custom_call.1} parent=1 // pred_check
      _
    $region19: #{tpu_custom_call.1} parent=1 // pred_check_branch
      %89 = sbr.rel (0) target = $region21
    $region20: #{tpu_custom_call.1} parent=1 // pred_region
      %s91 = ssub.s32 128, 128
      %92 = vsyncadd [#allocation4], %s91
      %s93 = sshll.u32 [#allocation5], 4
      %s94 = int_to_ptr.vmem [resolvable:$true] %s93
      %99 = dma.vmem_to_hbm [thread:$0]  %s94, 128, %s3, [#allocation4], 64, 64, 4
    $region21: #{tpu_custom_call.1} parent=1 // pred_fallthru
      _
    // Predicated region
    $region22: #{tpu_custom_call.1} parent=1 // pred_check
      _
    $region23: #{tpu_custom_call.1} parent=1 // pred_check_branch
      %101 = sbr.rel (0) target = $region25
    $region24: #{tpu_custom_call.1} parent=1 // pred_region
      %102 = dma.done [#allocation4], 128
    $region25: #{tpu_custom_call.1} parent=1 // pred_fallthru
      _
    %103 = vsyncpa [#allocation3], 1
    %104 = vsyncpa [#allocation4], 1

</llo_original>
